<compile_context>
chip_gen: v5e
topology: v5e:2x2
jax: 0.10.0
libtpu: 0.0.40
codegen_flags: <defaults>
</compile_context>

<pallas_src>
import functools
import math

import jax
import jax.numpy as jnp
from jax.experimental import pallas as pl
from jax.experimental.pallas import tpu as pltpu

LN_EPS = 1e-5
NEG_INF = -1e30  # finite large negative (avoids inf-inf NaNs)


def _vmem_budget():
    """Per-generation tile caps / scoped-VMEM budget."""
    try:
        cap = int(pltpu.get_tpu_info().vmem_capacity_bytes)
    except Exception:
        cap = 64 * 1024 * 1024
    if cap >= 100 * 1024 * 1024:            # v5e / v6e: 128 MiB VMEM
        return 96 * 1024 * 1024, 512, 512
    return 48 * 1024 * 1024, 256, 512       # v7x: 64 MiB VMEM


VMEM_LIMIT, MN_CAP, K_CAP = _vmem_budget()


def _tile(dim, cap, mult):
    """Largest divisor of dim that is <= cap, preferring multiples of `mult`."""
    if dim <= cap:
        return dim
    fallback = 1
    for t in range(cap, 0, -1):
        if dim % t == 0:
            if t % mult == 0:
                return t
            if fallback == 1:
                fallback = t
    return fallback


def _gelu_tanh(h):
    # exactly nn.GELU(approximate='tanh')
    c = math.sqrt(2.0 / math.pi)
    return 0.5 * h * (1.0 + jnp.tanh(c * (h + 0.044715 * h * h * h)))


# --------------------------------------------------------------------------
# Kernels
# --------------------------------------------------------------------------
def ln_linear_kernel(x_ref, g_ref, bln_ref, w_ref, b_ref, o_ref, xn_ref, *,
                     activation):
    """Fused LayerNorm + matmul + bias (+ optional GELU).

    LN(x) is computed once per row tile (j == 0) into a VMEM scratch and
    reused across all N tiles of that row block.
    """
    @pl.when(pl.program_id(1) == 0)
    def _():
        x = x_ref[...].astype(jnp.float32)
        mu = jnp.mean(x, axis=-1, keepdims=True)
        var = jnp.mean((x - mu) ** 2, axis=-1, keepdims=True)
        xn = (x - mu) * jax.lax.rsqrt(var + LN_EPS) * g_ref[...] + bln_ref[...]
        xn_ref[...] = xn.astype(xn_ref.dtype)

    h = jnp.dot(xn_ref[...], w_ref[...],
                preferred_element_type=jnp.float32) + b_ref[...]
    if activation == "gelu":
        h = _gelu_tanh(h)
    o_ref[...] = h.astype(o_ref.dtype)
    # TODO(synk): for very large C on v7x add K-tiling (two-pass LN stats)
    # instead of holding the full (tm, C) x / w tiles in VMEM.


def linear_residual_kernel(x_ref, w_ref, b_ref, res_ref, o_ref, acc_ref):
    """K-tiled matmul with f32 accumulator; bias + residual fused at finalize."""
    @pl.when(pl.program_id(2) == 0)
    def _():
        acc_ref[...] = jnp.zeros_like(acc_ref)

    acc_ref[...] += jnp.dot(x_ref[...], w_ref[...],
                            preferred_element_type=jnp.float32)

    @pl.when(pl.program_id(2) == pl.num_programs(2) - 1)
    def _():
        h = acc_ref[...] + b_ref[...] + res_ref[...].astype(jnp.float32)
        o_ref[...] = h.astype(o_ref.dtype)


def flash_attn_kernel(q_ref, k_ref, v_ref, o_ref, m_ref, l_ref, acc_ref, *,
                      scale, tq, tk):
    """Causal flash attention for one (batch, head, q-tile); kv tiles inner."""
    qi = pl.program_id(2)
    ki = pl.program_id(3)

    @pl.when(ki == 0)
    def _():
        m_ref[...] = jnp.full_like(m_ref, NEG_INF)
        l_ref[...] = jnp.zeros_like(l_ref)
        acc_ref[...] = jnp.zeros_like(acc_ref)

    # Skip kv tiles entirely above the causal diagonal.
    @pl.when(ki * tk <= qi * tq + (tq - 1))
    def _():
        q = (q_ref[0, 0].astype(jnp.float32) * scale).astype(q_ref.dtype)
        k = k_ref[0, 0]
        s = jax.lax.dot_general(q, k, dimension_numbers=(((1,), (1,)), ((), ())),
                                preferred_element_type=jnp.float32)   # (tq, tk)
        row = qi * tq + jax.lax.broadcasted_iota(jnp.int32, s.shape, 0)
        col = ki * tk + jax.lax.broadcasted_iota(jnp.int32, s.shape, 1)
        s = jnp.where(col <= row, s, NEG_INF)

        m_prev = m_ref[...]
        m_new = jnp.maximum(m_prev, jnp.max(s, axis=-1, keepdims=True))
        alpha = jnp.exp(m_prev - m_new)
        p = jnp.exp(s - m_new)
        l_ref[...] = alpha * l_ref[...] + jnp.sum(p, axis=-1, keepdims=True)
        acc_ref[...] = alpha * acc_ref[...] + jnp.dot(
            p.astype(v_ref.dtype), v_ref[0, 0],
            preferred_element_type=jnp.float32)
        m_ref[...] = m_new

    @pl.when(ki == pl.num_programs(3) - 1)
    def _():
        o_ref[0, 0] = (acc_ref[...] *
                       pl.reciprocal(l_ref[...], approx=True)).astype(o_ref.dtype)


def lm_head_xent_kernel(x_ref, g_ref, bln_ref, wte_ref, tgt_ref,
                        logits_ref, rowloss_ref,
                        xn_ref, m_ref, l_ref, tl_ref, *, tv, v_real):
    """Fused ln_f + tied lm_head + cross-entropy (online logsumexp over vocab).

    Writes logits tiles out (caller still gets them) but never re-reads them;
    per-row loss is emitted at the last vocab tile.
    """
    j = pl.program_id(1)

    @pl.when(j == 0)
    def _():
        x = x_ref[...].astype(jnp.float32)
        mu = jnp.mean(x, axis=-1, keepdims=True)
        var = jnp.mean((x - mu) ** 2, axis=-1, keepdims=True)
        xn = (x - mu) * jax.lax.rsqrt(var + LN_EPS) * g_ref[...] + bln_ref[...]
        xn_ref[...] = xn.astype(xn_ref.dtype)
        m_ref[...] = jnp.full_like(m_ref, NEG_INF)
        l_ref[...] = jnp.zeros_like(l_ref)
        tl_ref[...] = jnp.zeros_like(tl_ref)

    # lm_head consumes wte as [tv, C] directly (contract on C, no transpose).
    z = jax.lax.dot_general(xn_ref[...], wte_ref[...],
                            dimension_numbers=(((1,), (1,)), ((), ())),
                            preferred_element_type=jnp.float32)       # (tm, tv)
    logits_ref[...] = z

    col = j * tv + jax.lax.broadcasted_iota(jnp.int32, z.shape, 1)
    z_m = jnp.where(col < v_real, z, NEG_INF)      # mask padded vocab columns
    tgt = tgt_ref[...]                             # (tm, 1) int32
    tl_ref[...] += jnp.sum(jnp.where(col == tgt, z_m, 0.0), axis=-1,
                           keepdims=True)

    m_prev = m_ref[...]
    m_new = jnp.maximum(m_prev, jnp.max(z_m, axis=-1, keepdims=True))
    l_ref[...] = (jnp.exp(m_prev - m_new) * l_ref[...] +
                  jnp.sum(jnp.exp(z_m - m_new), axis=-1, keepdims=True))
    m_ref[...] = m_new

    @pl.when(j == pl.num_programs(1) - 1)
    def _():
        rowloss_ref[...] = (m_ref[...] + jnp.log(l_ref[...])) - tl_ref[...]


# --------------------------------------------------------------------------
# pallas_call wrappers
# --------------------------------------------------------------------------
def pallas_ln_linear(x, g, bln, w, b, activation=None):
    M, K = x.shape
    N = w.shape[1]
    tm = _tile(M, MN_CAP, 8)
    tn = _tile(N, MN_CAP, 128)
    kern = functools.partial(ln_linear_kernel, activation=activation)
    return pl.pallas_call(
        kern,
        out_shape=jax.ShapeDtypeStruct((M, N), x.dtype),
        grid=(M // tm, N // tn),
        in_specs=[
            pl.BlockSpec((tm, K), lambda i, j: (i, 0)),
            pl.BlockSpec((1, K), lambda i, j: (0, 0)),
            pl.BlockSpec((1, K), lambda i, j: (0, 0)),
            pl.BlockSpec((K, tn), lambda i, j: (0, j)),
            pl.BlockSpec((1, tn), lambda i, j: (0, j)),
        ],
        out_specs=pl.BlockSpec((tm, tn), lambda i, j: (i, j)),
        scratch_shapes=[pltpu.VMEM((tm, K), x.dtype)],
        compiler_params=pltpu.CompilerParams(
            dimension_semantics=("parallel", "arbitrary"),
            vmem_limit_bytes=VMEM_LIMIT),
    )(x, g.reshape(1, K), bln.reshape(1, K), w, b.reshape(1, N))


def pallas_linear_residual(x, w, b, residual):
    M, K = x.shape
    N = w.shape[1]
    tm = _tile(M, MN_CAP, 8)
    tn = _tile(N, MN_CAP, 128)
    tk = _tile(K, K_CAP, 128)
    return pl.pallas_call(
        linear_residual_kernel,
        out_shape=jax.ShapeDtypeStruct((M, N), x.dtype),
        grid=(M // tm, N // tn, K // tk),
        in_specs=[
            pl.BlockSpec((tm, tk), lambda i, j, k: (i, k)),
            pl.BlockSpec((tk, tn), lambda i, j, k: (k, j)),
            pl.BlockSpec((1, tn), lambda i, j, k: (0, j)),
            pl.BlockSpec((tm, tn), lambda i, j, k: (i, j)),
        ],
        out_specs=pl.BlockSpec((tm, tn), lambda i, j, k: (i, j)),
        scratch_shapes=[pltpu.VMEM((tm, tn), jnp.float32)],
        compiler_params=pltpu.CompilerParams(
            dimension_semantics=("parallel", "parallel", "arbitrary"),
            vmem_limit_bytes=VMEM_LIMIT),
    )(x, w, b.reshape(1, N), residual)


def pallas_flash_attention(q, k, v):
    B, H, T, D = q.shape
    tq = _tile(T, 256, 8)
    tk = _tile(T, 256, 8)
    scale = 1.0 / math.sqrt(D)
    kern = functools.partial(flash_attn_kernel, scale=scale, tq=tq, tk=tk)
    return pl.pallas_call(
        kern,
        out_shape=jax.ShapeDtypeStruct((B, H, T, D), q.dtype),
        grid=(B, H, T // tq, T // tk),
        in_specs=[
            pl.BlockSpec((1, 1, tq, D), lambda b, h, qi, ki: (b, h, qi, 0)),
            pl.BlockSpec((1, 1, tk, D), lambda b, h, qi, ki: (b, h, ki, 0)),
            pl.BlockSpec((1, 1, tk, D), lambda b, h, qi, ki: (b, h, ki, 0)),
        ],
        out_specs=pl.BlockSpec((1, 1, tq, D), lambda b, h, qi, ki: (b, h, qi, 0)),
        scratch_shapes=[
            pltpu.VMEM((tq, 1), jnp.float32),
            pltpu.VMEM((tq, 1), jnp.float32),
            pltpu.VMEM((tq, D), jnp.float32),
        ],
        compiler_params=pltpu.CompilerParams(
            dimension_semantics=("parallel", "parallel", "parallel", "arbitrary"),
            vmem_limit_bytes=VMEM_LIMIT),
    )(q, k, v)


def pallas_lm_head_xent(x, g, bln, wte_padded, targets, v_real):
    M, C = x.shape
    Vp = wte_padded.shape[0]
    tm = _tile(M, MN_CAP, 8)
    tv = _tile(Vp, MN_CAP, 128)
    kern = functools.partial(lm_head_xent_kernel, tv=tv, v_real=v_real)
    return pl.pallas_call(
        kern,
        out_shape=(jax.ShapeDtypeStruct((M, Vp), jnp.float32),
                   jax.ShapeDtypeStruct((M, 1), jnp.float32)),
        grid=(M // tm, Vp // tv),
        in_specs=[
            pl.BlockSpec((tm, C), lambda i, j: (i, 0)),
            pl.BlockSpec((1, C), lambda i, j: (0, 0)),
            pl.BlockSpec((1, C), lambda i, j: (0, 0)),
            pl.BlockSpec((tv, C), lambda i, j: (j, 0)),
            pl.BlockSpec((tm, 1), lambda i, j: (i, 0)),
        ],
        out_specs=(pl.BlockSpec((tm, tv), lambda i, j: (i, j)),
                   pl.BlockSpec((tm, 1), lambda i, j: (i, 0))),
        scratch_shapes=[
            pltpu.VMEM((tm, C), x.dtype),      # cached LN(x)
            pltpu.VMEM((tm, 1), jnp.float32),  # running max
            pltpu.VMEM((tm, 1), jnp.float32),  # running sum
            pltpu.VMEM((tm, 1), jnp.float32),  # target logit
        ],
        compiler_params=pltpu.CompilerParams(
            dimension_semantics=("parallel", "arbitrary"),
            vmem_limit_bytes=VMEM_LIMIT),
    )(x, g.reshape(1, C), bln.reshape(1, C), wte_padded, targets)


# --------------------------------------------------------------------------
# Parameter init (deterministic, mirrors module __init__ shapes)
# --------------------------------------------------------------------------
def init_params(key, cfg):
    C, V, P, L = cfg["n_emb"], cfg["vocab_size"], cfg["block_size"], cfg["n_layer"]
    Vp = ((V + 127) // 128) * 128           # lane-dense padded vocab
    keys = iter(jax.random.split(key, 4 + 8 * L))
    std = 0.02

    def nrm(shape):
        return (std * jax.random.normal(next(keys), shape, jnp.float32)).astype(jnp.bfloat16)

    wte = nrm((V, C))
    wte = jnp.pad(wte, ((0, Vp - V), (0, 0)))       # pad rows are zero
    params = {
        "wte": wte,                                 # [Vp, C], tied with lm_head
        "wpe": nrm((P, C)),
        "lnf_g": jnp.ones((C,), jnp.float32),
        "lnf_b": jnp.zeros((C,), jnp.float32),
        "layers": [],
    }
    for _ in range(L):
        params["layers"].append(
            dict(
                ln1_g=jnp.ones((C,), jnp.float32),
                ln1_b=jnp.zeros((C,), jnp.float32),
                attn_w=nrm((C, 3 * C)),
                attn_b=jnp.zeros((3 * C,), jnp.float32),
                proj_w=nrm((C, C)),
                proj_b=jnp.zeros((C,), jnp.float32),
                ln2_g=jnp.ones((C,), jnp.float32),
                ln2_b=jnp.zeros((C,), jnp.float32),
                fc_w=nrm((C, 4 * C)),
                fc_b=jnp.zeros((4 * C,), jnp.float32),
                mp_w=nrm((4 * C, C)),
                mp_b=jnp.zeros((C,), jnp.float32),
            )
        )
    return params


# --------------------------------------------------------------------------
# GPT forward (embedding gathers + layout plumbing in JAX, hot paths in Pallas)
# --------------------------------------------------------------------------
def gpt_forward(params, x_ids, target, cfg, start_idx=0):
    B, T = x_ids.shape
    C, H, V = cfg["n_emb"], cfg["n_head"], cfg["vocab_size"]
    D = C // H
    assert T <= cfg["block_size"]

    pos = jnp.arange(start_idx, start_idx + T)
    h = (jnp.take(params["wte"], x_ids, axis=0)
         + jnp.take(params["wpe"], pos, axis=0)[None]).astype(jnp.bfloat16)

    for lyr in params["layers"]:
        xf = h.reshape(B * T, C)
        # fused ln_1 + c_attn
        qkv = pallas_ln_linear(xf, lyr["ln1_g"], lyr["ln1_b"],
                               lyr["attn_w"], lyr["attn_b"])
        # head-major layout so BlockSpec/DMA does the per-head split
        # TODO(synk): emit head-major layout directly from the QKV matmul to
        # avoid this XLA transpose of the qkv activation.
        qkv = qkv.reshape(B, T, 3, H, D).transpose(2, 0, 3, 1, 4)  # (3,B,H,T,D)
        y = pallas_flash_attention(qkv[0], qkv[1], qkv[2])         # (B,H,T,D)
        y = y.transpose(0, 2, 1, 3).reshape(B * T, C)
        # c_proj (K-tiled matmul) with residual add fused at K-finalize
        h = pallas_linear_residual(y, lyr["proj_w"], lyr["proj_b"],
                                   residual=xf).reshape(B, T, C)

        xf2 = h.reshape(B * T, C)
        # fused ln_2 + c_fc + GELU(tanh)
        m = pallas_ln_linear(xf2, lyr["ln2_g"], lyr["ln2_b"],
                             lyr["fc_w"], lyr["fc_b"], activation="gelu")
        # mlp c_proj with residual fused
        h = pallas_linear_residual(m, lyr["mp_w"], lyr["mp_b"],
                                   residual=xf2).reshape(B, T, C)

    # fused ln_f + tied lm_head + cross-entropy (online LSE over vocab tiles)
    if target is not None:
        tgt = target.reshape(B * T, 1).astype(jnp.int32)
    else:
        tgt = jnp.zeros((B * T, 1), jnp.int32)   # dummy; loss discarded
    logits_p, row_losses = pallas_lm_head_xent(
        h.reshape(B * T, C), params["lnf_g"], params["lnf_b"],
        params["wte"], tgt, v_real=V)

    logits = logits_p[:, :V].reshape(B, T, V)
    loss = jnp.mean(row_losses) if target is not None else None
    return logits, loss

# TODO(synk): AttentionWithKVCache (use_kv_cache=True) decode path not
# implemented; default config uses the standard causal Attention path above.


# --------------------------------------------------------------------------
if __name__ == "__main__":
    cfg = dict(
        block_size=16,
        vocab_size=128,
        n_head=4,
        n_layer=2,
        n_emb=32,
        dropout=0.0,
        use_kv_cache=False,
    )
    B, T = 2, 8

    key = jax.random.PRNGKey(0)
    k_param, k_x, k_y = jax.random.split(key, 3)
    params = init_params(k_param, cfg)
    x_ids = jax.random.randint(k_x, (B, T), 0, cfg["vocab_size"], dtype=jnp.int32)
    target = jax.random.randint(k_y, (B, T), 0, cfg["vocab_size"], dtype=jnp.int32)

    logits, loss = gpt_forward(params, x_ids, target, cfg)
    jax.block_until_ready((logits, loss))

    assert logits.shape == (B, T, cfg["vocab_size"])
    assert logits.dtype == jnp.float32
    assert loss.shape == ()
    assert bool(jnp.isfinite(loss))
    print("KERNEL_OK")
</pallas_src>

<mosaic_0001>
module attributes {stable_mosaic.version = 11 : i64} {
  func.func @ln_linear_kernel(%arg0: i32, %arg1: i32, %arg2: memref<16x32xbf16, #tpu.memory_space<vmem>>, %arg3: memref<1x32xf32, #tpu.memory_space<vmem>>, %arg4: memref<1x32xf32, #tpu.memory_space<vmem>>, %arg5: memref<32x96xbf16, #tpu.memory_space<vmem>>, %arg6: memref<1x96xf32, #tpu.memory_space<vmem>>, %arg7: memref<16x96xbf16, #tpu.memory_space<vmem>>, %arg8: memref<16x32xbf16, #tpu.memory_space<vmem>>) attributes {dimension_semantics = [#tpu.dimension_semantics<parallel>, #tpu.dimension_semantics<arbitrary>], iteration_bounds = array<i64: 1, 1>, scalar_prefetch = 0 : i64, scratch_operands = 1 : i64, tpu.core_type = #tpu.core_type<tc>, window_params = [{transform_indices = @transform_0, window_bounds = array<i64: 16, 32>}, {pipeline_mode = #tpu.pipeline_mode<synchronous>, transform_indices = @transform_1, window_bounds = array<i64: 1, 32>}, {pipeline_mode = #tpu.pipeline_mode<synchronous>, transform_indices = @transform_2, window_bounds = array<i64: 1, 32>}, {transform_indices = @transform_3, window_bounds = array<i64: 32, 96>}, {transform_indices = @transform_4, window_bounds = array<i64: 1, 96>}, {transform_indices = @transform_5, window_bounds = array<i64: 16, 96>}]} {
    %c0_i32 = arith.constant 0 : i32
    %0 = arith.cmpi eq, %arg1, %c0_i32 : i32
    %1 = arith.extui %0 : i1 to i32
    %c0_i32_0 = arith.constant 0 : i32
    %2 = arith.cmpi ne, %1, %c0_i32_0 : i32
    scf.if %2 {
      %c0_8 = arith.constant 0 : index
      %c0_9 = arith.constant 0 : index
      %11 = vector.load %arg2[%c0_8, %c0_9] : memref<16x32xbf16, #tpu.memory_space<vmem>>, vector<16x32xbf16>
      %12 = arith.extf %11 : vector<16x32xbf16> to vector<16x32xf32>
      %cst_10 = arith.constant dense<0.000000e+00> : vector<16xf32>
      %13 = vector.multi_reduction <add>, %12, %cst_10 [1] : vector<16x32xf32> to vector<16xf32>
      %14 = vector.shape_cast %13 : vector<16xf32> to vector<16x1xf32>
      %cst_11 = arith.constant 3.200000e+01 : f32
      %15 = vector.broadcast %cst_11 : f32 to vector<16x1xf32>
      %16 = arith.divf %14, %15 : vector<16x1xf32>
      %17 = vector.broadcast %16 : vector<16x1xf32> to vector<16x32xf32>
      %18 = arith.subf %12, %17 : vector<16x32xf32>
      %19 = arith.mulf %18, %18 : vector<16x32xf32>
      %cst_12 = arith.constant dense<0.000000e+00> : vector<16xf32>
      %20 = vector.multi_reduction <add>, %19, %cst_12 [1] : vector<16x32xf32> to vector<16xf32>
      %21 = vector.shape_cast %20 : vector<16xf32> to vector<16x1xf32>
      %cst_13 = arith.constant 3.200000e+01 : f32
      %22 = vector.broadcast %cst_13 : f32 to vector<16x1xf32>
      %23 = arith.divf %21, %22 : vector<16x1xf32>
      %24 = vector.broadcast %16 : vector<16x1xf32> to vector<16x32xf32>
      %25 = arith.subf %12, %24 : vector<16x32xf32>
      %cst_14 = arith.constant 9.99999974E-6 : f32
      %26 = vector.broadcast %cst_14 : f32 to vector<16x1xf32>
      %27 = arith.addf %23, %26 : vector<16x1xf32>
      %28 = math.rsqrt %27 : vector<16x1xf32>
      %29 = vector.broadcast %28 : vector<16x1xf32> to vector<16x32xf32>
      %30 = arith.mulf %25, %29 : vector<16x32xf32>
      %c0_15 = arith.constant 0 : index
      %c0_16 = arith.constant 0 : index
      %31 = vector.load %arg3[%c0_15, %c0_16] : memref<1x32xf32, #tpu.memory_space<vmem>>, vector<1x32xf32>
      %32 = vector.broadcast %31 : vector<1x32xf32> to vector<16x32xf32>
      %33 = arith.mulf %30, %32 : vector<16x32xf32>
      %c0_17 = arith.constant 0 : index
      %c0_18 = arith.constant 0 : index
      %34 = vector.load %arg4[%c0_17, %c0_18] : memref<1x32xf32, #tpu.memory_space<vmem>>, vector<1x32xf32>
      %35 = vector.broadcast %34 : vector<1x32xf32> to vector<16x32xf32>
      %36 = arith.addf %33, %35 : vector<16x32xf32>
      %37 = arith.truncf %36 : vector<16x32xf32> to vector<16x32xbf16>
      %c0_19 = arith.constant 0 : index
      %c0_20 = arith.constant 0 : index
      %38 = vector.load %arg8[%c0_19, %c0_20] : memref<16x32xbf16, #tpu.memory_space<vmem>>, vector<16x32xbf16>
      tpu.vector_store %arg8[%c0_19, %c0_20], %37 {strides = array<i32>} : memref<16x32xbf16, #tpu.memory_space<vmem>>, vector<16x32xbf16>,
    } else {
    }
    %c0 = arith.constant 0 : index
    %c0_1 = arith.constant 0 : index
    %3 = vector.load %arg8[%c0, %c0_1] : memref<16x32xbf16, #tpu.memory_space<vmem>>, vector<16x32xbf16>
    %c0_2 = arith.constant 0 : index
    %c0_3 = arith.constant 0 : index
    %4 = vector.load %arg5[%c0_2, %c0_3] : memref<32x96xbf16, #tpu.memory_space<vmem>>, vector<32x96xbf16>
    %cst = arith.constant dense<0.000000e+00> : vector<16x96xf32>
    %5 = tpu.matmul %3, %4, %cst {dimension_numbers = #tpu.dot_dimension_numbers<[1], [0], [0], [1], [0, 0, 1, 1], [], []>} : vector<16x32xbf16>, vector<32x96xbf16>, vector<16x96xf32> -> vector<16x96xf32>
    %c0_4 = arith.constant 0 : index
    %c0_5 = arith.constant 0 : index
    %6 = vector.load %arg6[%c0_4, %c0_5] : memref<1x96xf32, #tpu.memory_space<vmem>>, vector<1x96xf32>
    %7 = vector.broadcast %6 : vector<1x96xf32> to vector<16x96xf32>
    %8 = arith.addf %5, %7 : vector<16x96xf32>
    %9 = arith.truncf %8 : vector<16x96xf32> to vector<16x96xbf16>
    %c0_6 = arith.constant 0 : index
    %c0_7 = arith.constant 0 : index
    %10 = vector.load %arg7[%c0_6, %c0_7] : memref<16x96xbf16, #tpu.memory_space<vmem>>, vector<16x96xbf16>
    tpu.vector_store %arg7[%c0_6, %c0_7], %9 {strides = array<i32>} : memref<16x96xbf16, #tpu.memory_space<vmem>>, vector<16x96xbf16>,
    return
  }
  func.func @transform_0(%arg0: i32, %arg1: i32) -> (i32, i32) {
    %c0_i32 = arith.constant 0 : i32
    %c0_i32_0 = arith.constant 0 : i32
    return %arg0, %c0_i32 : i32, i32
  }
  func.func @transform_1(%arg0: i32, %arg1: i32) -> (i32, i32) {
    %c0_i32 = arith.constant 0 : i32
    %c0_i32_0 = arith.constant 0 : i32
    %c0_i32_1 = arith.constant 0 : i32
    return %c0_i32, %c0_i32_0 : i32, i32
  }
  func.func @transform_2(%arg0: i32, %arg1: i32) -> (i32, i32) {
    %c0_i32 = arith.constant 0 : i32
    %c0_i32_0 = arith.constant 0 : i32
    %c0_i32_1 = arith.constant 0 : i32
    return %c0_i32, %c0_i32_0 : i32, i32
  }
  func.func @transform_3(%arg0: i32, %arg1: i32) -> (i32, i32) {
    %c0_i32 = arith.constant 0 : i32
    %c0_i32_0 = arith.constant 0 : i32
    return %c0_i32, %arg1 : i32, i32
  }
  func.func @transform_4(%arg0: i32, %arg1: i32) -> (i32, i32) {
    %c0_i32 = arith.constant 0 : i32
    %c0_i32_0 = arith.constant 0 : i32
    return %c0_i32, %arg1 : i32, i32
  }
  func.func @transform_5(%arg0: i32, %arg1: i32) -> (i32, i32) {
    %c0_i32 = arith.constant 0 : i32
    return %arg0, %arg1 : i32, i32
  }
}

</mosaic_0001>

<llo_original>
// kernel: tpu_custom_call.1
$region0: #{tpu_custom_call.1}
  #allocation0 [shape = 'u32[]', space=smem, size = 0x4, offset = 0x4, fixed_abs, tag = 'smem constant byte address 0x4 - core index']
  #allocation1 [shape = 'u32[72,128]{1,0:T(1,128)}', space=vmem, size = 0x9000, scoped, tag = 'internal scratch']
  #allocation2 [shape = 'bf16[16,32]{1,0:T(8,128)(2,1)}', space=vmem, size = 0x1000, scoped, tag = 'scratch operand']
  %s0 = inlined_call_operand.hbm [shape: bf16[16,32], index: 0, kind: input, shape index: {}]
  %s1 = inlined_call_operand.hbm [shape: f32[1,32], index: 1, kind: input, shape index: {}]
  %s2 = inlined_call_operand.vmem [shape: f32[1,32], index: 2, kind: input, shape index: {}]
  %s3 = inlined_call_operand.hbm [shape: bf16[32,96], index: 3, kind: input, shape index: {}]
  %s4 = inlined_call_operand.vmem [shape: f32[1,96], index: 4, kind: input, shape index: {}]
  %s5 = inlined_call_operand.hbm [shape: bf16[16,96], index: 5, kind: output, shape index: {}]
  %s6 = sld [smem:[#allocation0]]
  $region46: #{tpu_custom_call.1} parent=0
    _
  %s8 = ssub.s32 1, %s6
  %s9 = scalar_select 0, %s8, %s6
  $region1: #{tpu_custom_call.1} parent=0
    #allocation3 [shape = 'u8[4096]{0}', space=vmem, size = 0x1000, scoped, tag = 'input window, operand 0, single buffered']
    #allocation4 [shape = 's32[1]{0}', space=sflag, size = 0x4, scoped, tag = 'scoped memory for tpu_custom_call.1']
    #allocation5 [shape = 's32[1]{0}', space=sflag, size = 0x4, scoped, tag = 'scoped memory for tpu_custom_call.1']
    #allocation6 [shape = 'u8[512]{0}', space=vmem, size = 0x400, scoped, tag = 'input window, operand 1, single buffered']
    #allocation7 [shape = 's32[1]{0}', space=sflag, size = 0x4, scoped, tag = 'scoped memory for tpu_custom_call.1']
    #allocation8 [shape = 'u8[8192]{0}', space=vmem, size = 0x2000, scoped, tag = 'input window, operand 3, single buffered']
    #allocation9 [shape = 'u8[4096]{0}', space=vmem, size = 0x1000, scoped, tag = 'output window, operand 0, single buffered']
    %10 = vsyncpa [#allocation4], 0
    %11 = vsyncpa [#allocation7], 0
    %12 = vsyncpa [#allocation5], 0
    // Predicated region
    $region2: #{tpu_custom_call.1} parent=1 // pred_check
      _
    $region3: #{tpu_custom_call.1} parent=1 // pred_check_branch
      %14 = sbr.rel (0) target = $region5
    $region4: #{tpu_custom_call.1} parent=1 // pred_region
      %16 = vsyncadd [#allocation4], 0
      %s17 = sshll.u32 %s0, 4
      %s18 = int_to_ptr.hbm [resolvable:$true] %s17
      %s19 = sshll.u32 [#allocation3], 4
      %s20 = int_to_ptr.vmem [resolvable:$true] %s19
      %25 = dma.hbm_to_vmem [thread:$0]  %s18, 128, %s20, [#allocation4], 64, 64, 4
    $region5: #{tpu_custom_call.1} parent=1 // pred_fallthru
      _
    // Predicated region
    $region6: #{tpu_custom_call.1} parent=1 // pred_check
      _
    $region7: #{tpu_custom_call.1} parent=1 // pred_check_branch
      %27 = sbr.rel (0) target = $region9
    $region8: #{tpu_custom_call.1} parent=1 // pred_region
      %29 = vsyncadd [#allocation7], 0
      %s31 = sshll.u32 %s1, 4
      %s32 = int_to_ptr.hbm [resolvable:$true] %s31
      %s33 = sshll.u32 [#allocation6], 4
      %s34 = int_to_ptr.vmem [resolvable:$true] %s33
      %36 = dma.hbm_to_vmem [thread:$0]  %s32, 16, %s34, [#allocation7]
    $region9: #{tpu_custom_call.1} parent=1 // pred_fallthru
      _
    // Predicated region
    $region10: #{tpu_custom_call.1} parent=1 // pred_check
      _
    $region11: #{tpu_custom_call.1} parent=1 // pred_check_branch
      %38 = sbr.rel (0) target = $region13
    $region12: #{tpu_custom_call.1} parent=1 // pred_region
      _
    $region13: #{tpu_custom_call.1} parent=1 // pred_fallthru
      _
    // Predicated region
    $region14: #{tpu_custom_call.1} parent=1 // pred_check
      _
    $region15: #{tpu_custom_call.1} parent=1 // pred_check_branch
      %40 = sbr.rel (0) target = $region17
    $region16: #{tpu_custom_call.1} parent=1 // pred_region
      %42 = vsyncadd [#allocation7], 0
      %s43 = sshll.u32 %s3, 4
      %s44 = int_to_ptr.hbm [resolvable:$true] %s43
      %s45 = sshll.u32 [#allocation8], 4
      %s46 = int_to_ptr.vmem [resolvable:$true] %s45
      %51 = dma.hbm_to_vmem [thread:$0]  %s44, 256, %s46, [#allocation7], 64, 64, 4
    $region17: #{tpu_custom_call.1} parent=1 // pred_fallthru
      _
    // Predicated region
    $region18: #{tpu_custom_call.1} parent=1 // pred_check
      _
    $region19: #{tpu_custom_call.1} parent=1 // pred_check_branch
      %53 = sbr.rel (0) target = $region21
    $region20: #{tpu_custom_call.1} parent=1 // pred_region
      _
    $region21: #{tpu_custom_call.1} parent=1 // pred_fallthru
      _
    // Predicated region
    $region22: #{tpu_custom_call.1} parent=1 // pred_check
      _
    $region23: #{tpu_custom_call.1} parent=1 // pred_check_branch
      %55 = sbr.rel (0) target = $region25
    $region24: #{tpu_custom_call.1} parent=1 // pred_region
      %57 = dma.done [#allocation4], 128
    $region25: #{tpu_custom_call.1} parent=1 // pred_fallthru
      _
    // Predicated region
    $region26: #{tpu_custom_call.1} parent=1 // pred_check
      _
    $region27: #{tpu_custom_call.1} parent=1 // pred_check_branch
      %59 = sbr.rel (0) target = $region29
    $region28: #{tpu_custom_call.1} parent=1 // pred_region
      %61 = dma.done [#allocation7], 16
    $region29: #{tpu_custom_call.1} parent=1 // pred_fallthru
      _
    // Predicated region
    $region30: #{tpu_custom_call.1} parent=1 // pred_check
      _
    $region31: #{tpu_custom_call.1} parent=1 // pred_check_branch
      %63 = sbr.rel (0) target = $region33
    $region32: #{tpu_custom_call.1} parent=1 // pred_region
      %65 = dma.done [#allocation7], 256
    $region33: #{tpu_custom_call.1} parent=1 // pred_fallthru
      _
    %p67 = scmp.eq.s32.totalorder 0, 0
    // Predicated region
    $region34: #{tpu_custom_call.1} parent=1 // pred_check
      %p68 = pneg %p67
    $region35: #{tpu_custom_call.1} parent=1 // pred_check_branch
      %70 = sbr.rel (%p68) target = $region37
    $region36: #{tpu_custom_call.1} parent=1 // pred_region
      %v71 = vld [vmem:[#allocation3] sm:$0xf]
      %v72 = vld [vmem:[#allocation3 + $0x4] sm:$0xf]
      %v73 = vunpack.c.l.bf16 %v71
      %v74 = vunpack.c.l.bf16 %v72
      %vm75 = vcmask 261120
      %v76 = vsel %vm75, %v73, 0.0
      %77 = vadd.xlane.f32.xlu0 %v76
      %v78 = vpop.xlane.xlu0 %77
      %v79 = vsel %vm75, %v74, 0.0
      %80 = vadd.xlane.f32.xlu0 %v79
      %v81 = vpop.xlane.xlu0 %80
      %v82 = vrcp.pop 32.0
      %v83 = vmul.f32 32.0, %v82
      %v84 = vsub.f32 1.0, %v83
      %v85 = vmul.f32 %v82, %v84
      %v86 = vadd.f32 %v82, %v85
      %vm87 = vweird.f32 %v82
      %v88 = vsel %vm87, %v82, %v86
      %v89 = vmul.f32 %v78, %v88
      %v90 = vmul.f32 %v81, %v88
      %v91 = vsub.f32 %v73, %v89
      %v92 = vsub.f32 %v74, %v90
      %v93 = vmul.f32 %v91, %v91
      %v94 = vmul.f32 %v92, %v92
      %v95 = vsel %vm75, %v93, 0.0
      %96 = vadd.xlane.f32.xlu0 %v95
      %v97 = vpop.xlane.xlu0 %96
      %v98 = vsel %vm75, %v94, 0.0
      %99 = vadd.xlane.f32.xlu0 %v98
      %v100 = vpop.xlane.xlu0 %99
      %v101 = vmul.f32 %v97, %v88
      %v102 = vmul.f32 %v100, %v88
      %v103 = vadd.f32 %v101, 1e-05
      %v104 = vadd.f32 %v102, 1e-05
      %v105 = vrsqrt.pop %v103
      %v106 = vmul.f32 %v105, %v103
      %v107 = vmul.f32 %v106, %v105
      %v108 = vmul.f32 0.5, %v107
      %v109 = vsub.f32 1.5, %v108
      %v110 = vmul.f32 %v105, %v109
      %vm111 = vweird.f32 %v103
      %vm112 = vweird.f32 %v105
      %vm113 = vmor %vm111, %vm112
      %v114 = vsel %vm113, %v105, %v110
      %v115 = vrsqrt.pop %v104
      %v116 = vmul.f32 %v115, %v104
      %v117 = vmul.f32 %v116, %v115
      %v118 = vmul.f32 0.5, %v117
      %v119 = vsub.f32 1.5, %v118
      %v120 = vmul.f32 %v115, %v119
      %vm121 = vweird.f32 %v104
      %vm122 = vweird.f32 %v115
      %vm123 = vmor %vm121, %vm122
      %v124 = vsel %vm123, %v115, %v120
      %v125 = vmul.f32 %v91, %v114
      %v126 = vmul.f32 %v92, %v124
      %v127 = vld [vmem:[#allocation6] sm:$0x1]
      %v129 = vperm.slane %v127, 0
      %v131 = vmul.f32 %v125, %v129
      %v132 = vmul.f32 %v126, %v129
      %v133 = vld [vmem:[%s2] sm:$0x1]
      %v135 = vperm.slane %v133, 0
      %v137 = vadd.f32 %v131, %v135
      %v138 = vadd.f32 %v132, %v135
      %v139 = vpack.c.bf16 %v137, %v137
      %v140 = vpack.c.bf16 %v138, %v138
      %vm141 = vcmask 257024
      %142 = vst.msk [vmem:[#allocation2] sm:$0xf] %vm141, %v139
      %143 = vst.msk [vmem:[#allocation2 + $0x4] sm:$0xf] %vm141, %v140
    $region37: #{tpu_custom_call.1} parent=1 // pred_fallthru
      _
    %v144 = vld [vmem:[#allocation2] sm:$0xf]
    %v145 = vld [vmem:[#allocation2 + $0x4] sm:$0xf]
    %v146 = vld [vmem:[#allocation8] sm:$0xf]
    %v147 = vld [vmem:[#allocation8 + $0x4] sm:$0xf]
    %v148 = vld [vmem:[#allocation8 + $0x8] sm:$0xf]
    %v149 = vld [vmem:[#allocation8 + $0xc] sm:$0xf]
    %v150 = vld [vmem:[%s4] sm:$0x1]
    %v152 = vperm.slane %v150, 0
    %v156 = vunpack.c.l.b16 %v144
    %v157 = vunpack.c.l.b16 %v145
    %v158 = vpack.c.b16 %v157, %v156
    %v163 = vunpack.c.l.b16 %v146
    %v164 = vunpack.c.l.b16 %v147
    %v165 = vunpack.c.l.b16 %v148
    %v166 = vunpack.c.l.b16 %v149
    %v167 = vpack.c.b16 %v164, %v163
    %v168 = vpack.c.b16 %v166, %v165
    %vm171 = vcmask 261120
    %v173 = vsel %vm171, %v158, 0
    %175 = vmatpush.bf16.msra.mxu0 0
    %176 = vmatpush.bf16.msra.mxu0 0
    %177 = vmatpush.bf16.msra.mxu0 0
    %178 = vmatpush.bf16.msra.mxu0 0
    %179 = vmatpush.bf16.msra.mxu0 0
    %180 = vmatpush.bf16.msra.mxu0 0
    %181 = vmatpush.bf16.msra.mxu0 %v168
    %182 = vmatpush.bf16.msra.mxu0 %v167
    %183 = vmatmul.bf16.gmra.mxu0 %v173
    %v184 = vpop.f32.mrf.mxu0
    %v185 = vadd.f32 %v152, %v184
    %v186 = vpop.f32.mrf.mxu0
    %v187 = vadd.f32 %v152, %v186
    %188 = vdwg.mxu0
    %v189 = vpack.c.bf16 %v185, %v185
    %v190 = vpack.c.bf16 %v187, %v187
    %vm191 = vcmask 781312
    %192 = vst.msk [vmem:[#allocation9] sm:$0xf] %vm191, %v189
    %193 = vst.msk [vmem:[#allocation9 + $0x4] sm:$0xf] %vm191, %v190
    // Predicated region
    $region38: #{tpu_custom_call.1} parent=1 // pred_check
      _
    $region39: #{tpu_custom_call.1} parent=1 // pred_check_branch
      %195 = sbr.rel (0) target = $region41
    $region40: #{tpu_custom_call.1} parent=1 // pred_region
      %197 = vsyncadd [#allocation5], 0
      %s198 = sshll.u32 [#allocation9], 4
      %s199 = int_to_ptr.vmem [resolvable:$true] %s198
      %s200 = sshll.u32 %s5, 4
      %s201 = int_to_ptr.hbm [resolvable:$true] %s200
      %206 = dma.vmem_to_hbm [thread:$0]  %s199, 128, %s201, [#allocation5], 64, 64, 4
    $region41: #{tpu_custom_call.1} parent=1 // pred_fallthru
      _
    // Predicated region
    $region42: #{tpu_custom_call.1} parent=1 // pred_check
      _
    $region43: #{tpu_custom_call.1} parent=1 // pred_check_branch
      %208 = sbr.rel (0) target = $region45
    $region44: #{tpu_custom_call.1} parent=1 // pred_region
      %210 = dma.done [#allocation5], 128
    $region45: #{tpu_custom_call.1} parent=1 // pred_fallthru
      _
    %211 = vsyncpa [#allocation4], 1
    %212 = vsyncpa [#allocation7], 1
    %213 = vsyncpa [#allocation5], 1

</llo_original>
